<compile_context>
chip_gen: v5e
topology: v5e:2x2
jax: 0.10.0
libtpu: 0.0.40
codegen_flags: <defaults>
</compile_context>

<pallas_src>
import jax
import jax.numpy as jnp
from jax.experimental import pallas as pl
from jax.experimental.pallas import tpu as pltpu


def _round_up(a, b):
    return ((a + b - 1) // b) * b


# itemsize -> minimum sublane rows for a legal tile
_SUBLANE_UNIT = {4: 8, 2: 16, 1: 32}


def _vmem_capacity_bytes():
    """Physical VMEM per core; falls back to the most conservative (v7x) value."""
    try:
        info = pltpu.get_tpu_info()
        for name in ("vmem_capacity_bytes", "vmem_size_bytes", "vmem_bytes"):
            v = getattr(info, name, None)
            if v:
                return int(v)
    except Exception:
        pass
    return 64 << 20  # v7x per-TensorCore VMEM (worst case)


# ----------------------------- kernels -------------------------------------


def _mm_kernel_single_k(x_ref, w_ref, o_ref):
    # Whole K in one block: no accumulator, no reduction axis.
    o_ref[...] = jnp.dot(
        x_ref[...], w_ref[...], preferred_element_type=jnp.float32
    ).astype(o_ref.dtype)


def _mm_kernel_multi_k_f32out(x_ref, w_ref, o_ref):
    # Output block is resident across the (innermost) K axis -> accumulate in place.
    @pl.when(pl.program_id(2) == 0)
    def _():
        o_ref[...] = jnp.zeros_like(o_ref)

    o_ref[...] += jnp.dot(x_ref[...], w_ref[...], preferred_element_type=jnp.float32)


def _mm_kernel_multi_k_acc(x_ref, w_ref, o_ref, acc_ref):
    # Non-f32 output: accumulate in an f32 scratch, cast once at the end.
    @pl.when(pl.program_id(2) == 0)
    def _():
        acc_ref[...] = jnp.zeros_like(acc_ref)

    acc_ref[...] += jnp.dot(x_ref[...], w_ref[...], preferred_element_type=jnp.float32)

    @pl.when(pl.program_id(2) == pl.num_programs(2) - 1)
    def _():
        o_ref[...] = acc_ref[...].astype(o_ref.dtype)


# ----------------------------- module --------------------------------------


class VheadPallas:
    """y = x @ weight.T (no bias), matching nn.Linear(ins, outs, bias=False).

    weight: (outs, ins) in the native PyTorch layout. All padding / casting /
    transposition of the (potentially vocab-sized) weight happens ONCE here;
    the per-call hot path only touches the small activation tensor.
    """

    def __init__(self, weight, *, weight_dtype=None, tn=None,
                 tk_full_cap=8192, tk_fallback=512, tm_cap=256,
                 vmem_fraction=0.6):
        outs, ins = weight.shape
        self.outs, self.ins = int(outs), int(ins)

        if weight_dtype is not None:
            weight = weight.astype(weight_dtype)   # one-time cast (e.g. bf16 streaming)
        self.w_dtype = weight.dtype
        w_itemsize = jnp.dtype(self.w_dtype).itemsize

        # --- K tiling: prefer whole-K in one block (single-K fast path). -----
        k128 = _round_up(self.ins, 128)
        tk = k128 if k128 <= tk_full_cap else _round_up(tk_fallback, 128)
        self.tk = int(tk)
        self.K_pad = _round_up(self.ins, self.tk)
        self.kg = self.K_pad // self.tk

        # --- N tiling: size the weight tile from the device VMEM budget. -----
        n128 = _round_up(self.outs, 128)
        vmem_cap = _vmem_capacity_bytes()
        budget = int(vmem_fraction * vmem_cap)
        tm_assume = tm_cap
        x_bytes = 2 * tm_assume * self.tk * 4              # f32 x, double-buffered
        slack = 4 << 20
        per_lane = 2 * self.tk * w_itemsize + 2 * tm_assume * 4  # weight + f32 out
        if tn is None:
            tn = (budget - x_bytes - slack) // per_lane
            tn = max(128, (tn // 128) * 128)
        tn = min(int(tn), 2048, n128)
        # keep >= 2 N blocks so v7x's 2 TensorCores both get weight-stream work
        if n128 >= 256:
            tn = min(tn, max(128, ((n128 // 2) // 128) * 128))
        self.tn = int(tn)
        self.N_pad = _round_up(self.outs, self.tn)
        self.tm_cap = int(tm_cap)

        # --- One-time pad + transpose; kept resident and reused every call. ---
        w = weight
        if (self.N_pad, self.K_pad) != (self.outs, self.ins):
            w = jnp.pad(w, ((0, self.N_pad - self.outs), (0, self.K_pad - self.ins)))
        self.w_t = jax.block_until_ready(jnp.transpose(w))   # (K_pad, N_pad)

    def __call__(self, x):
        assert x.shape[-1] == self.ins, "last dim of x must equal ins"
        lead = x.shape[:-1]
        out_dtype = x.dtype

        # Cast activations (small) to the streamed weight dtype; accumulate in f32.
        xc = x if x.dtype == self.w_dtype else x.astype(self.w_dtype)
        x2d = xc.reshape(-1, self.ins)
        M = x2d.shape[0]

        itemsize = jnp.dtype(self.w_dtype).itemsize
        unit = _SUBLANE_UNIT.get(itemsize, 8)
        tm_cap = max(_round_up(self.tm_cap, unit), unit)
        tm_cand = _round_up(max(M, 1), unit)
        if tm_cand <= tm_cap:
            tm = tm_cand            # mg == 1: weight streamed from HBM exactly once
        else:
            tm = tm_cap             # mg > 1: weight re-streamed mg times (large M)
        M_pad = _round_up(max(M, 1), tm)
        mg = M_pad // tm

        if (M_pad, self.K_pad) != (M, self.ins):
            x2d = jnp.pad(x2d, ((0, M_pad - M), (0, self.K_pad - self.ins)))

        tn, tk, kg = self.tn, self.tk, self.kg
        ng = self.N_pad // tn

        out_itemsize = jnp.dtype(out_dtype).itemsize
        use_scratch = (kg > 1) and (jnp.dtype(out_dtype) != jnp.dtype(jnp.float32))
        vmem_bytes = (2 * tm * tk * itemsize            # x   (double-buffered)
                      + 2 * tk * tn * itemsize          # W^T (double-buffered)
                      + 2 * tm * tn * out_itemsize      # out (double-buffered)
                      + (tm * tn * 4 if use_scratch else 0)
                      + (4 << 20))
        vmem_cap = _vmem_capacity_bytes()
        vmem_bytes = int(min(max(vmem_bytes, 16 << 20), int(0.75 * vmem_cap)))

        if kg == 1:
            grid = (ng, mg)
            in_specs = [
                pl.BlockSpec((tm, tk), lambda j, i: (i, 0)),
                pl.BlockSpec((tk, tn), lambda j, i: (0, j)),
            ]
            out_specs = pl.BlockSpec((tm, tn), lambda j, i: (i, j))
            kernel = _mm_kernel_single_k
            scratch = []
            dim_sem = ("parallel", "parallel")
        else:
            # N outermost, M middle, K innermost (reduction).
            grid = (ng, mg, kg)
            in_specs = [
                pl.BlockSpec((tm, tk), lambda j, i, k: (i, k)),
                pl.BlockSpec((tk, tn), lambda j, i, k: (k, j)),
            ]
            out_specs = pl.BlockSpec((tm, tn), lambda j, i, k: (i, j))
            if use_scratch:
                kernel = _mm_kernel_multi_k_acc
                scratch = [pltpu.VMEM((tm, tn), jnp.float32)]
            else:
                kernel = _mm_kernel_multi_k_f32out
                scratch = []
            dim_sem = ("parallel", "parallel", "arbitrary")

        out2d = pl.pallas_call(
            kernel,
            out_shape=jax.ShapeDtypeStruct((M_pad, self.N_pad), out_dtype),
            grid_spec=pltpu.PrefetchScalarGridSpec(
                num_scalar_prefetch=0,
                grid=grid,
                in_specs=in_specs,
                out_specs=out_specs,
                scratch_shapes=scratch,
            ),
            compiler_params=pltpu.CompilerParams(
                dimension_semantics=dim_sem,
                vmem_limit_bytes=vmem_bytes,
            ),
        )(x2d, self.w_t)

        if (M_pad, self.N_pad) != (M, self.outs):
            out2d = out2d[:M, :self.outs]
        return out2d.reshape(*lead, self.outs)


if __name__ == "__main__":
    key = jax.random.PRNGKey(0)

    # Config A: ragged K and N (like ins=6566/outs=32000 in the real module, scaled
    # down), single-K fast path, f32.
    batch, seq = 2, 8
    ins, outs = 518, 1000
    kx, kw, key = jax.random.split(key, 3)
    x = jax.random.normal(kx, (batch, seq, ins), dtype=jnp.float32)
    weight = jax.random.normal(kw, (outs, ins), dtype=jnp.float32) * 0.02

    head = VheadPallas(weight)                      # one-time pad/transpose at init
    y = jax.block_until_ready(head(x))
    y_ref = jnp.einsum("bsi,oi->bso", x, weight)
    assert y.shape == (batch, seq, outs)
    assert jnp.allclose(y, y_ref, atol=5e-4, rtol=5e-4)

    # Config B: force the split-K path (accumulate directly into the f32 output block).
    batch2, seq2 = 2, 4
    ins2, outs2 = 512, 512
    kx2, kw2, key = jax.random.split(key, 3)
    x2 = jax.random.normal(kx2, (batch2, seq2, ins2), dtype=jnp.float32)
    weight2 = jax.random.normal(kw2, (outs2, ins2), dtype=jnp.float32) * 0.02

    head2 = VheadPallas(weight2, tk_full_cap=256, tk_fallback=256)   # kg = 2
    y2 = jax.block_until_ready(head2(x2))
    y2_ref = jnp.einsum("bsi,oi->bso", x2, weight2)
    assert y2.shape == (batch2, seq2, outs2)
    assert jnp.allclose(y2, y2_ref, atol=5e-4, rtol=5e-4)

    # Config C: bf16 weight streaming (one-time cast at init), f32 accumulation/output.
    head3 = VheadPallas(weight, weight_dtype=jnp.bfloat16)
    y3 = jax.block_until_ready(head3(x))
    assert y3.shape == (batch, seq, outs)
    assert jnp.allclose(y3, y_ref, atol=5e-2, rtol=5e-2)

    print("KERNEL_OK")
</pallas_src>

<mosaic_0001>
module attributes {stable_mosaic.version = 11 : i64} {
  func.func @_mm_kernel_single_k(%arg0: i32, %arg1: i32, %arg2: memref<16x640xf32, #tpu.memory_space<vmem>>, %arg3: memref<640x512xf32, #tpu.memory_space<vmem>>, %arg4: memref<16x512xf32, #tpu.memory_space<vmem>>) attributes {dimension_semantics = [#tpu.dimension_semantics<parallel>, #tpu.dimension_semantics<parallel>], iteration_bounds = array<i64: 2, 1>, scalar_prefetch = 0 : i64, scratch_operands = 0 : i64, tpu.core_type = #tpu.core_type<tc>, window_params = [{transform_indices = @transform_0, window_bounds = array<i64: 16, 640>}, {transform_indices = @transform_1, window_bounds = array<i64: 640, 512>}, {transform_indices = @transform_2, window_bounds = array<i64: 16, 512>}]} {
    %c0 = arith.constant 0 : index
    %c0_0 = arith.constant 0 : index
    %0 = vector.load %arg2[%c0, %c0_0] : memref<16x640xf32, #tpu.memory_space<vmem>>, vector<16x640xf32>
    %c0_1 = arith.constant 0 : index
    %c0_2 = arith.constant 0 : index
    %1 = vector.load %arg3[%c0_1, %c0_2] : memref<640x512xf32, #tpu.memory_space<vmem>>, vector<640x512xf32>
    %cst = arith.constant dense<0.000000e+00> : vector<16x512xf32>
    %2 = tpu.matmul %0, %1, %cst {dimension_numbers = #tpu.dot_dimension_numbers<[1], [0], [0], [1], [0, 0, 1, 1], [], []>} : vector<16x640xf32>, vector<640x512xf32>, vector<16x512xf32> -> vector<16x512xf32>
    %c0_3 = arith.constant 0 : index
    %c0_4 = arith.constant 0 : index
    %3 = vector.load %arg4[%c0_3, %c0_4] : memref<16x512xf32, #tpu.memory_space<vmem>>, vector<16x512xf32>
    tpu.vector_store %arg4[%c0_3, %c0_4], %2 {strides = array<i32>} : memref<16x512xf32, #tpu.memory_space<vmem>>, vector<16x512xf32>,
    return
  }
  func.func @transform_0(%arg0: i32, %arg1: i32) -> (i32, i32) {
    %c0_i32 = arith.constant 0 : i32
    %c0_i32_0 = arith.constant 0 : i32
    return %arg1, %c0_i32 : i32, i32
  }
  func.func @transform_1(%arg0: i32, %arg1: i32) -> (i32, i32) {
    %c0_i32 = arith.constant 0 : i32
    %c0_i32_0 = arith.constant 0 : i32
    return %c0_i32, %arg0 : i32, i32
  }
  func.func @transform_2(%arg0: i32, %arg1: i32) -> (i32, i32) {
    %c0_i32 = arith.constant 0 : i32
    return %arg1, %arg0 : i32, i32
  }
}

</mosaic_0001>

<llo_original>
// kernel: tpu_custom_call.1
$region0: #{tpu_custom_call.1}
  #allocation0 [shape = 'u32[]', space=smem, size = 0x4, offset = 0x4, fixed_abs, tag = 'smem constant byte address 0x4 - core index']
  #allocation1 [shape = 'u32[72,128]{1,0:T(1,128)}', space=vmem, size = 0x9000, scoped, tag = 'internal scratch']
  %s0 = inlined_call_operand.hbm [shape: f32[16,640], index: 0, kind: input, shape index: {}]
  %s1 = inlined_call_operand.hbm [shape: f32[640,1024], index: 1, kind: input, shape index: {}]
  %s2 = inlined_call_operand.hbm [shape: f32[16,1024], index: 2, kind: output, shape index: {}]
  %s3 = sld [smem:[#allocation0]]
  $region49: #{tpu_custom_call.1} parent=0
    _
  %s5 = ssub.s32 1, %s3
  %s6 = scalar_select 0, %s5, %s3
  $region1: #{tpu_custom_call.1} parent=0
    #allocation2 [shape = 'u8[40960]{0}', space=vmem, size = 0xa000, scoped, tag = 'input window, operand 0, single buffered']
    #allocation3 [shape = 's32[2]{0}', space=sflag, size = 0x8, scoped, tag = 'scoped memory for tpu_custom_call.1']
    #allocation4 [shape = 's32[2]{0}', space=sflag, size = 0x8, scoped, tag = 'scoped memory for tpu_custom_call.1']
    #allocation5 [shape = 'u8[2621440]{0}', space=vmem, size = 0x280000, scoped, tag = 'input window, operand 1']
    #allocation6 [shape = 's32[2]{0}', space=sflag, size = 0x8, scoped, tag = 'scoped memory for tpu_custom_call.1']
    #allocation7 [shape = 'u8[65536]{0}', space=vmem, size = 0x10000, scoped, tag = 'output window, operand 0']
    %7 = vsyncpa [#allocation3], 0
    %8 = vsyncpa [#allocation6], 0
    %s9 = scalar_lea.sflag [#allocation6], 1
    %10 = vsyncpa %s9, 0
    %11 = vsyncpa [#allocation4], 0
    %s12 = scalar_lea.sflag [#allocation4], 1
    %13 = vsyncpa %s12, 0
    loop: start=0, step=1, limit=4
    $region2: #{tpu_custom_call.1} parent=1 // loop_pre_header
      _
    $region3: #{tpu_custom_call.1} parent=1 // loop_header
      %s15 = sphi 0, %s19
      %p16 = scmp.ge.s32.totalorder %s15, 4
      %s22 = sphi 0, %s34
      %s23 = sphi 0, %s30
      %s24 = sphi 0, %s22
      %s25 = sphi 0, %s23
      %s26 = sphi 0, %s24
      %s27 = sphi 0, %s25
      %s37 = sphi 0, %s39
      %s40 = sphi 0, %s37
      %s41 = sphi 0, %s40
      %s57 = sphi 0, %s41
      %s63 = sphi 0, %s65
      %s66 = sphi 0, %s63
      %s67 = sphi 0, %s66
      %s83 = sphi 0, %s67
      %s91 = sphi 0, %s93
      %s94 = sphi 0, %s91
      %s95 = sphi 0, %s94
      %s111 = sphi 0, %s95
    $region4: #{tpu_custom_call.1} parent=1 // loop_header_branch
      %18 = sbr.rel (%p16) target = $region8
    $region5: #{tpu_custom_call.1} parent=1 // loop_body
      %s20 = ssub.s32 %s15, 1
      %s21 = ssub.s32 %s15, 2
      %s28 = sadd.s32 1, %s23
      %p29 = scmp.ge.s32.totalorder %s28, 1
      %s30 = scalar_select %p29, 0, %s28
      %s31 = sadd.s32 1, %s22
      %s32 = scalar_select %p29, %s31, %s22
      %p33 = scmp.ge.s32.totalorder %s32, 2
      %s34 = scalar_select %p33, 0, %s32
      %s35 = ssub.s32 %s23, %s30
      %p36 = scmp.eq.s32.totalorder %s35, 0
      %s38 = sadd.s32 %s37, 1
      %s39 = scalar_select %p36, %s37, %s38
      %p42 = pneg %p36
      %p43 = scmp.eq.s32.totalorder %s15, 1
      %p44 = por %p42, %p43
      %p45 = scmp.ne.s32.totalorder %s37, %s40
      %p46 = scmp.eq.s32.totalorder %s15, 0
      %p47 = por %p45, %p46
      %p48 = scmp.ne.s32.totalorder %s37, %s40
      %p49 = scmp.eq.s32.totalorder %s20, 1
      %p50 = por %p48, %p49
      %p51 = scmp.ne.s32.totalorder %s40, %s41
      %p52 = scmp.eq.s32.totalorder %s20, 0
      %p53 = por %p51, %p52
      %p54 = scmp.ne.s32.totalorder %s40, %s41
      %p55 = scmp.eq.s32.totalorder %s21, 1
      %p56 = por %p54, %p55
      %p58 = scmp.ne.s32.totalorder %s41, %s57
      %p59 = scmp.eq.s32.totalorder %s21, 0
      %p60 = por %p58, %p59
      %s61 = ssub.s32 %s22, %s34
      %p62 = scmp.eq.s32.totalorder %s61, 0
      %s64 = sadd.s32 %s63, 1
      %s65 = scalar_select %p62, %s63, %s64
      %p68 = pneg %p62
      %p69 = scmp.eq.s32.totalorder %s15, 1
      %p70 = por %p68, %p69
      %p71 = scmp.ne.s32.totalorder %s63, %s66
      %p72 = scmp.eq.s32.totalorder %s15, 0
      %p73 = por %p71, %p72
      %p74 = scmp.ne.s32.totalorder %s63, %s66
      %p75 = scmp.eq.s32.totalorder %s20, 1
      %p76 = por %p74, %p75
      %p77 = scmp.ne.s32.totalorder %s66, %s67
      %p78 = scmp.eq.s32.totalorder %s20, 0
      %p79 = por %p77, %p78
      %p80 = scmp.ne.s32.totalorder %s66, %s67
      %p81 = scmp.eq.s32.totalorder %s21, 1
      %p82 = por %p80, %p81
      %p84 = scmp.ne.s32.totalorder %s67, %s83
      %p85 = scmp.eq.s32.totalorder %s21, 0
      %p86 = por %p84, %p85
      %s87 = ssub.s32 %s23, %s30
      %s88 = ssub.s32 %s22, %s34
      %s89 = sor.u32 %s87, %s88
      %p90 = scmp.eq.s32.totalorder %s89, 0
      %s92 = sadd.s32 %s91, 1
      %s93 = scalar_select %p90, %s91, %s92
      %p96 = pneg %p90
      %p97 = scmp.eq.s32.totalorder %s15, 1
      %p98 = por %p96, %p97
      %p99 = scmp.ne.s32.totalorder %s91, %s94
      %p100 = scmp.eq.s32.totalorder %s15, 0
      %p101 = por %p99, %p100
      %p102 = scmp.ne.s32.totalorder %s91, %s94
      %p103 = scmp.eq.s32.totalorder %s20, 1
      %p104 = por %p102, %p103
      %p105 = scmp.ne.s32.totalorder %s94, %s95
      %p106 = scmp.eq.s32.totalorder %s20, 0
      %p107 = por %p105, %p106
      %p108 = scmp.ne.s32.totalorder %s94, %s95
      %p109 = scmp.eq.s32.totalorder %s21, 1
      %p110 = por %p108, %p109
      %p112 = scmp.ne.s32.totalorder %s95, %s111
      %p113 = scmp.eq.s32.totalorder %s21, 0
      %p114 = por %p112, %p113
      %p115 = scmp.le.s32.totalorder 1, %s15
      %p116 = scmp.lt.s32.totalorder %s15, 3
      %p117 = pnand %p115, %p116
      %p118 = pneg %p117
      // Predicated region
      $region9: #{tpu_custom_call.1} parent=5 // pred_check
        _
      $region10: #{tpu_custom_call.1} parent=5 // pred_check_branch
        %120 = sbr.rel (%p117) target = $region12
      $region11: #{tpu_custom_call.1} parent=5 // pred_region
        %s121 = ssub.s32 %s15, 1
        // Predicated region
        $region13: #{tpu_custom_call.1} parent=11 // pred_check
          %p122 = pneg %p53
        $region14: #{tpu_custom_call.1} parent=11 // pred_check_branch
          %124 = sbr.rel (%p122) target = $region16
        $region15: #{tpu_custom_call.1} parent=11 // pred_region
          %s125 = smul.u32 2, %s25
          %127 = vsyncadd [#allocation3], 0
          %s128 = smul.addr %s125, 5
          %s129 = smul.addr %s128, 8
          %s130 = scalar_lea.hbm %s0, %s129
          %s131 = sshll.u32 %s130, 4
          %s132 = int_to_ptr.hbm [resolvable:$true] %s131
          %s133 = sshll.u32 [#allocation2], 4
          %s134 = int_to_ptr.vmem [resolvable:$true] %s133
          %139 = dma.hbm_to_vmem [thread:$0]  %s132, 1280, %s134, [#allocation3], 640, 640, 40
        $region16: #{tpu_custom_call.1} parent=11 // pred_fallthru
          _
      $region12: #{tpu_custom_call.1} parent=5 // pred_fallthru
        _
      %p140 = scmp.lt.s32.totalorder %s15, 2
      // Predicated region
      $region17: #{tpu_custom_call.1} parent=5 // pred_check
        %p141 = pneg %p140
      $region18: #{tpu_custom_call.1} parent=5 // pred_check_branch
        %143 = sbr.rel (%p141) target = $region20
      $region19: #{tpu_custom_call.1} parent=5 // pred_region
        // Predicated region
        $region21: #{tpu_custom_call.1} parent=19 // pred_check
          %p144 = pneg %p73
        $region22: #{tpu_custom_call.1} parent=19 // pred_check_branch
          %146 = sbr.rel (%p144) target = $region24
        $region23: #{tpu_custom_call.1} parent=19 // pred_region
          %s147 = sand.u32 %s63, 1
          %s148 = scalar_lea.sflag [#allocation6], %s147
          %s149 = sand.u32 %s63, 1
          %s150 = smul.addr %s149, 2560
          %s151 = scalar_lea.vmem [#allocation5], %s150
          %s152 = smul.u32 4, %s22
          %154 = vsyncadd %s148, 0
          %s155 = smul.addr %s152, 8
          %s156 = scalar_lea.hbm %s1, %s155
          %s157 = sshll.u32 %s156, 4
          %s158 = int_to_ptr.hbm [resolvable:$true] %s157
          %s159 = sshll.u32 %s151, 4
          %s160 = int_to_ptr.vmem [resolvable:$true] %s159
          %165 = dma.hbm_to_vmem [thread:$0]  %s158, 40960, %s160, %s148, 1024, 512, 32
        $region24: #{tpu_custom_call.1} parent=19 // pred_fallthru
          _
      $region20: #{tpu_custom_call.1} parent=5 // pred_fallthru
        _
      %p166 = scmp.le.s32.totalorder 1, %s15
      %p167 = scmp.lt.s32.totalorder %s15, 3
      %p168 = pnand %p166, %p167
      %p169 = pneg %p168
      // Predicated region
      $region25: #{tpu_custom_call.1} parent=5 // pred_check
        _
      $region26: #{tpu_custom_call.1} parent=5 // pred_check_branch
        %171 = sbr.rel (%p168) target = $region28
      $region27: #{tpu_custom_call.1} parent=5 // pred_region
        %s172 = ssub.s32 %s15, 1
        // Predicated region
        $region29: #{tpu_custom_call.1} parent=27 // pred_check
          %p173 = pneg %p53
        $region30: #{tpu_custom_call.1} parent=27 // pred_check_branch
          %175 = sbr.rel (%p173) target = $region32
        $region31: #{tpu_custom_call.1} parent=27 // pred_region
          %177 = dma.done [#allocation3], 1280
        $region32: #{tpu_custom_call.1} parent=27 // pred_fallthru
          _
        %s178 = sand.u32 %s66, 1
        %s179 = scalar_lea.sflag [#allocation6], %s178
        %s180 = sand.u32 %s66, 1
        %s181 = smul.addr %s180, 2560
        %s182 = scalar_lea.vmem [#allocation5], %s181
        // Predicated region
        $region33: #{tpu_custom_call.1} parent=27 // pred_check
          %p183 = pneg %p79
        $region34: #{tpu_custom_call.1} parent=27 // pred_check_branch
          %185 = sbr.rel (%p183) target = $region36
        $region35: #{tpu_custom_call.1} parent=27 // pred_region
          %187 = dma.done %s179, 40960
        $region36: #{tpu_custom_call.1} parent=27 // pred_fallthru
          _
        %p188 = pneg %p53
        %p189 = pneg %p50
        %s190 = sand.u32 %s66, 1
        %s191 = scalar_lea.sflag [#allocation6], %s190
        %s192 = sand.u32 %s66, 1
        %s193 = smul.addr %s192, 2560
        %s194 = scalar_lea.vmem [#allocation5], %s193
        %p195 = pneg %p79
        %p196 = pneg %p76
        %p197 = pneg %p107
        %p198 = pneg %p104
        %s199 = sand.u32 %s94, 1
        %s200 = scalar_lea.sflag [#allocation4], %s199
        %s201 = sand.u32 %s94, 1
        %s202 = smul.addr %s201, 64
        %s203 = scalar_lea.vmem [#allocation7], %s202
        %s204 = smul.u32 2, %s25
        %s205 = smul.u32 4, %s24
        %s206 = smul.u32 2, %s25
        %s207 = smul.u32 4, %s24
        %v208 = vld [vmem:[#allocation2] sm:$0xff]
        %v209 = vld [vmem:[#allocation2 + $0x8] sm:$0xff]
        %v210 = vld [vmem:[#allocation2 + $0x10] sm:$0xff]
        %v211 = vld [vmem:[#allocation2 + $0x18] sm:$0xff]
        %v212 = vld [vmem:[#allocation2 + $0x20] sm:$0xff]
        %v213 = vld [vmem:[#allocation2 + $0x28] sm:$0xff]
        %v214 = vld [vmem:[#allocation2 + $0x30] sm:$0xff]
        %v215 = vld [vmem:[#allocation2 + $0x38] sm:$0xff]
        %v216 = vld [vmem:[#allocation2 + $0x40] sm:$0xff]
        %v217 = vld [vmem:[#allocation2 + $0x48] sm:$0xff]
        %v218 = vld [vmem:[%s182] sm:$0xff]
        %v219 = vld [vmem:[%s182 + $0x8] sm:$0xff]
        %v220 = vld [vmem:[%s182 + $0x10] sm:$0xff]
        %v221 = vld [vmem:[%s182 + $0x18] sm:$0xff]
        %v222 = vld [vmem:[%s182 + $0x20] sm:$0xff]
        %v223 = vld [vmem:[%s182 + $0x28] sm:$0xff]
        %v224 = vld [vmem:[%s182 + $0x30] sm:$0xff]
        %v225 = vld [vmem:[%s182 + $0x38] sm:$0xff]
        %v226 = vld [vmem:[%s182 + $0x40] sm:$0xff]
        %v227 = vld [vmem:[%s182 + $0x48] sm:$0xff]
        %v228 = vld [vmem:[%s182 + $0x50] sm:$0xff]
        %v229 = vld [vmem:[%s182 + $0x58] sm:$0xff]
        %v230 = vld [vmem:[%s182 + $0x60] sm:$0xff]
        %v231 = vld [vmem:[%s182 + $0x68] sm:$0xff]
        %v232 = vld [vmem:[%s182 + $0x70] sm:$0xff]
        %v233 = vld [vmem:[%s182 + $0x78] sm:$0xff]
        %v234 = vld [vmem:[%s182 + $0x80] sm:$0xff]
        %v235 = vld [vmem:[%s182 + $0x88] sm:$0xff]
        %v236 = vld [vmem:[%s182 + $0x90] sm:$0xff]
        %v237 = vld [vmem:[%s182 + $0x98] sm:$0xff]
        %v238 = vld [vmem:[%s182 + $0xa0] sm:$0xff]
        %v239 = vld [vmem:[%s182 + $0xa8] sm:$0xff]
        %v240 = vld [vmem:[%s182 + $0xb0] sm:$0xff]
        %v241 = vld [vmem:[%s182 + $0xb8] sm:$0xff]
        %v242 = vld [vmem:[%s182 + $0xc0] sm:$0xff]
        %v243 = vld [vmem:[%s182 + $0xc8] sm:$0xff]
        %v244 = vld [vmem:[%s182 + $0xd0] sm:$0xff]
        %v245 = vld [vmem:[%s182 + $0xd8] sm:$0xff]
        %v246 = vld [vmem:[%s182 + $0xe0] sm:$0xff]
        %v247 = vld [vmem:[%s182 + $0xe8] sm:$0xff]
        %v248 = vld [vmem:[%s182 + $0xf0] sm:$0xff]
        %v249 = vld [vmem:[%s182 + $0xf8] sm:$0xff]
        %v250 = vld [vmem:[%s182 + $0x100] sm:$0xff]
        %v251 = vld [vmem:[%s182 + $0x108] sm:$0xff]
        %v252 = vld [vmem:[%s182 + $0x110] sm:$0xff]
        %v253 = vld [vmem:[%s182 + $0x118] sm:$0xff]
        %v254 = vld [vmem:[%s182 + $0x120] sm:$0xff]
        %v255 = vld [vmem:[%s182 + $0x128] sm:$0xff]
        %v256 = vld [vmem:[%s182 + $0x130] sm:$0xff]
        %v257 = vld [vmem:[%s182 + $0x138] sm:$0xff]
        %v258 = vld [vmem:[%s182 + $0x140] sm:$0xff]
        %v259 = vld [vmem:[%s182 + $0x148] sm:$0xff]
        %v260 = vld [vmem:[%s182 + $0x150] sm:$0xff]
        %v261 = vld [vmem:[%s182 + $0x158] sm:$0xff]
        %v262 = vld [vmem:[%s182 + $0x160] sm:$0xff]
        %v263 = vld [vmem:[%s182 + $0x168] sm:$0xff]
        %v264 = vld [vmem:[%s182 + $0x170] sm:$0xff]
        %v265 = vld [vmem:[%s182 + $0x178] sm:$0xff]
        %v266 = vld [vmem:[%s182 + $0x180] sm:$0xff]
        %v267 = vld [vmem:[%s182 + $0x188] sm:$0xff]
        %v268 = vld [vmem:[%s182 + $0x190] sm:$0xff]
        %v269 = vld [vmem:[%s182 + $0x198] sm:$0xff]
        %v270 = vld [vmem:[%s182 + $0x1a0] sm:$0xff]
        %v271 = vld [vmem:[%s182 + $0x1a8] sm:$0xff]
        %v272 = vld [vmem:[%s182 + $0x1b0] sm:$0xff]
        %v273 = vld [vmem:[%s182 + $0x1b8] sm:$0xff]
        %v274 = vld [vmem:[%s182 + $0x1c0] sm:$0xff]
        %v275 = vld [vmem:[%s182 + $0x1c8] sm:$0xff]
        %v276 = vld [vmem:[%s182 + $0x1d0] sm:$0xff]
        %v277 = vld [vmem:[%s182 + $0x1d8] sm:$0xff]
        %v278 = vld [vmem:[%s182 + $0x1e0] sm:$0xff]
        %v279 = vld [vmem:[%s182 + $0x1e8] sm:$0xff]
        %v280 = vld [vmem:[%s182 + $0x1f0] sm:$0xff]
        %v281 = vld [vmem:[%s182 + $0x1f8] sm:$0xff]
        %v282 = vld [vmem:[%s182 + $0x200] sm:$0xff]
        %v283 = vld [vmem:[%s182 + $0x208] sm:$0xff]
        %v284 = vld [vmem:[%s182 + $0x210] sm:$0xff]
        %v285 = vld [vmem:[%s182 + $0x218] sm:$0xff]
        %v286 = vld [vmem:[%s182 + $0x220] sm:$0xff]
        %v287 = vld [vmem:[%s182 + $0x228] sm:$0xff]
        %v288 = vld [vmem:[%s182 + $0x230] sm:$0xff]
        %v289 = vld [vmem:[%s182 + $0x238] sm:$0xff]
        %v290 = vld [vmem:[%s182 + $0x240] sm:$0xff]
        %v291 = vld [vmem:[%s182 + $0x248] sm:$0xff]
        %v292 = vld [vmem:[%s182 + $0x250] sm:$0xff]
        %v293 = vld [vmem:[%s182 + $0x258] sm:$0xff]
        %v294 = vld [vmem:[%s182 + $0x260] sm:$0xff]
        %v295 = vld [vmem:[%s182 + $0x268] sm:$0xff]
        %v296 = vld [vmem:[%s182 + $0x270] sm:$0xff]
        %v297 = vld [vmem:[%s182 + $0x278] sm:$0xff]
        %v298 = vld [vmem:[%s182 + $0x280] sm:$0xff]
        %v299 = vld [vmem:[%s182 + $0x288] sm:$0xff]
        %v300 = vld [vmem:[%s182 + $0x290] sm:$0xff]
        %v301 = vld [vmem:[%s182 + $0x298] sm:$0xff]
        %v302 = vld [vmem:[%s182 + $0x2a0] sm:$0xff]
        %v303 = vld [vmem:[%s182 + $0x2a8] sm:$0xff]
        %v304 = vld [vmem:[%s182 + $0x2b0] sm:$0xff]
        %v305 = vld [vmem:[%s182 + $0x2b8] sm:$0xff]
        %v306 = vld [vmem:[%s182 + $0x2c0] sm:$0xff]
        %v307 = vld [vmem:[%s182 + $0x2c8] sm:$0xff]
        %v308 = vld [vmem:[%s182 + $0x2d0] sm:$0xff]
        %v309 = vld [vmem:[%s182 + $0x2d8] sm:$0xff]
        %v310 = vld [vmem:[%s182 + $0x2e0] sm:$0xff]
        %v311 = vld [vmem:[%s182 + $0x2e8] sm:$0xff]
        %v312 = vld [vmem:[%s182 + $0x2f0] sm:$0xff]
        %v313 = vld [vmem:[%s182 + $0x2f8] sm:$0xff]
        %v314 = vld [vmem:[%s182 + $0x300] sm:$0xff]
        %v315 = vld [vmem:[%s182 + $0x308] sm:$0xff]
        %v316 = vld [vmem:[%s182 + $0x310] sm:$0xff]
        %v317 = vld [vmem:[%s182 + $0x318] sm:$0xff]
        %v318 = vld [vmem:[%s182 + $0x320] sm:$0xff]
        %v319 = vld [vmem:[%s182 + $0x328] sm:$0xff]
        %v320 = vld [vmem:[%s182 + $0x330] sm:$0xff]
        %v321 = vld [vmem:[%s182 + $0x338] sm:$0xff]
        %v322 = vld [vmem:[%s182 + $0x340] sm:$0xff]
        %v323 = vld [vmem:[%s182 + $0x348] sm:$0xff]
        %v324 = vld [vmem:[%s182 + $0x350] sm:$0xff]
        %v325 = vld [vmem:[%s182 + $0x358] sm:$0xff]
        %v326 = vld [vmem:[%s182 + $0x360] sm:$0xff]
        %v327 = vld [vmem:[%s182 + $0x368] sm:$0xff]
        %v328 = vld [vmem:[%s182 + $0x370] sm:$0xff]
        %v329 = vld [vmem:[%s182 + $0x378] sm:$0xff]
        %v330 = vld [vmem:[%s182 + $0x380] sm:$0xff]
        %v331 = vld [vmem:[%s182 + $0x388] sm:$0xff]
        %v332 = vld [vmem:[%s182 + $0x390] sm:$0xff]
        %v333 = vld [vmem:[%s182 + $0x398] sm:$0xff]
        %v334 = vld [vmem:[%s182 + $0x3a0] sm:$0xff]
        %v335 = vld [vmem:[%s182 + $0x3a8] sm:$0xff]
        %v336 = vld [vmem:[%s182 + $0x3b0] sm:$0xff]
        %v337 = vld [vmem:[%s182 + $0x3b8] sm:$0xff]
        %v338 = vld [vmem:[%s182 + $0x3c0] sm:$0xff]
        %v339 = vld [vmem:[%s182 + $0x3c8] sm:$0xff]
        %v340 = vld [vmem:[%s182 + $0x3d0] sm:$0xff]
        %v341 = vld [vmem:[%s182 + $0x3d8] sm:$0xff]
        %v342 = vld [vmem:[%s182 + $0x3e0] sm:$0xff]
        %v343 = vld [vmem:[%s182 + $0x3e8] sm:$0xff]
        %v344 = vld [vmem:[%s182 + $0x3f0] sm:$0xff]
        %v345 = vld [vmem:[%s182 + $0x3f8] sm:$0xff]
        %v346 = vld [vmem:[%s182 + $0x400] sm:$0xff]
        %v347 = vld [vmem:[%s182 + $0x408] sm:$0xff]
        %v348 = vld [vmem:[%s182 + $0x410] sm:$0xff]
        %v349 = vld [vmem:[%s182 + $0x418] sm:$0xff]
        %v350 = vld [vmem:[%s182 + $0x420] sm:$0xff]
        %v351 = vld [vmem:[%s182 + $0x428] sm:$0xff]
        %v352 = vld [vmem:[%s182 + $0x430] sm:$0xff]
        %v353 = vld [vmem:[%s182 + $0x438] sm:$0xff]
        %v354 = vld [vmem:[%s182 + $0x440] sm:$0xff]
        %v355 = vld [vmem:[%s182 + $0x448] sm:$0xff]
        %v356 = vld [vmem:[%s182 + $0x450] sm:$0xff]
        %v357 = vld [vmem:[%s182 + $0x458] sm:$0xff]
        %v358 = vld [vmem:[%s182 + $0x460] sm:$0xff]
        %v359 = vld [vmem:[%s182 + $0x468] sm:$0xff]
        %v360 = vld [vmem:[%s182 + $0x470] sm:$0xff]
        %v361 = vld [vmem:[%s182 + $0x478] sm:$0xff]
        %v362 = vld [vmem:[%s182 + $0x480] sm:$0xff]
        %v363 = vld [vmem:[%s182 + $0x488] sm:$0xff]
        %v364 = vld [vmem:[%s182 + $0x490] sm:$0xff]
        %v365 = vld [vmem:[%s182 + $0x498] sm:$0xff]
        %v366 = vld [vmem:[%s182 + $0x4a0] sm:$0xff]
        %v367 = vld [vmem:[%s182 + $0x4a8] sm:$0xff]
        %v368 = vld [vmem:[%s182 + $0x4b0] sm:$0xff]
        %v369 = vld [vmem:[%s182 + $0x4b8] sm:$0xff]
        %v370 = vld [vmem:[%s182 + $0x4c0] sm:$0xff]
        %v371 = vld [vmem:[%s182 + $0x4c8] sm:$0xff]
        %v372 = vld [vmem:[%s182 + $0x4d0] sm:$0xff]
        %v373 = vld [vmem:[%s182 + $0x4d8] sm:$0xff]
        %v374 = vld [vmem:[%s182 + $0x4e0] sm:$0xff]
        %v375 = vld [vmem:[%s182 + $0x4e8] sm:$0xff]
        %v376 = vld [vmem:[%s182 + $0x4f0] sm:$0xff]
        %v377 = vld [vmem:[%s182 + $0x4f8] sm:$0xff]
        %v378 = vld [vmem:[%s182 + $0x500] sm:$0xff]
        %v379 = vld [vmem:[%s182 + $0x508] sm:$0xff]
        %v380 = vld [vmem:[%s182 + $0x510] sm:$0xff]
        %v381 = vld [vmem:[%s182 + $0x518] sm:$0xff]
        %v382 = vld [vmem:[%s182 + $0x520] sm:$0xff]
        %v383 = vld [vmem:[%s182 + $0x528] sm:$0xff]
        %v384 = vld [vmem:[%s182 + $0x530] sm:$0xff]
        %v385 = vld [vmem:[%s182 + $0x538] sm:$0xff]
        %v386 = vld [vmem:[%s182 + $0x540] sm:$0xff]
        %v387 = vld [vmem:[%s182 + $0x548] sm:$0xff]
        %v388 = vld [vmem:[%s182 + $0x550] sm:$0xff]
        %v389 = vld [vmem:[%s182 + $0x558] sm:$0xff]
        %v390 = vld [vmem:[%s182 + $0x560] sm:$0xff]
        %v391 = vld [vmem:[%s182 + $0x568] sm:$0xff]
        %v392 = vld [vmem:[%s182 + $0x570] sm:$0xff]
        %v393 = vld [vmem:[%s182 + $0x578] sm:$0xff]
        %v394 = vld [vmem:[%s182 + $0x580] sm:$0xff]
        %v395 = vld [vmem:[%s182 + $0x588] sm:$0xff]
        %v396 = vld [vmem:[%s182 + $0x590] sm:$0xff]
        %v397 = vld [vmem:[%s182 + $0x598] sm:$0xff]
        %v398 = vld [vmem:[%s182 + $0x5a0] sm:$0xff]
        %v399 = vld [vmem:[%s182 + $0x5a8] sm:$0xff]
        %v400 = vld [vmem:[%s182 + $0x5b0] sm:$0xff]
        %v401 = vld [vmem:[%s182 + $0x5b8] sm:$0xff]
        %v402 = vld [vmem:[%s182 + $0x5c0] sm:$0xff]
        %v403 = vld [vmem:[%s182 + $0x5c8] sm:$0xff]
        %v404 = vld [vmem:[%s182 + $0x5d0] sm:$0xff]
        %v405 = vld [vmem:[%s182 + $0x5d8] sm:$0xff]
        %v406 = vld [vmem:[%s182 + $0x5e0] sm:$0xff]
        %v407 = vld [vmem:[%s182 + $0x5e8] sm:$0xff]
        %v408 = vld [vmem:[%s182 + $0x5f0] sm:$0xff]
        %v409 = vld [vmem:[%s182 + $0x5f8] sm:$0xff]
        %v410 = vld [vmem:[%s182 + $0x600] sm:$0xff]
        %v411 = vld [vmem:[%s182 + $0x608] sm:$0xff]
        %v412 = vld [vmem:[%s182 + $0x610] sm:$0xff]
        %v413 = vld [vmem:[%s182 + $0x618] sm:$0xff]
        %v414 = vld [vmem:[%s182 + $0x620] sm:$0xff]
        %v415 = vld [vmem:[%s182 + $0x628] sm:$0xff]
        %v416 = vld [vmem:[%s182 + $0x630] sm:$0xff]
        %v417 = vld [vmem:[%s182 + $0x638] sm:$0xff]
        %v418 = vld [vmem:[%s182 + $0x640] sm:$0xff]
        %v419 = vld [vmem:[%s182 + $0x648] sm:$0xff]
        %v420 = vld [vmem:[%s182 + $0x650] sm:$0xff]
        %v421 = vld [vmem:[%s182 + $0x658] sm:$0xff]
        %v422 = vld [vmem:[%s182 + $0x660] sm:$0xff]
        %v423 = vld [vmem:[%s182 + $0x668] sm:$0xff]
        %v424 = vld [vmem:[%s182 + $0x670] sm:$0xff]
        %v425 = vld [vmem:[%s182 + $0x678] sm:$0xff]
        %v426 = vld [vmem:[%s182 + $0x680] sm:$0xff]
        %v427 = vld [vmem:[%s182 + $0x688] sm:$0xff]
        %v428 = vld [vmem:[%s182 + $0x690] sm:$0xff]
        %v429 = vld [vmem:[%s182 + $0x698] sm:$0xff]
        %v430 = vld [vmem:[%s182 + $0x6a0] sm:$0xff]
        %v431 = vld [vmem:[%s182 + $0x6a8] sm:$0xff]
        %v432 = vld [vmem:[%s182 + $0x6b0] sm:$0xff]
        %v433 = vld [vmem:[%s182 + $0x6b8] sm:$0xff]
        %v434 = vld [vmem:[%s182 + $0x6c0] sm:$0xff]
        %v435 = vld [vmem:[%s182 + $0x6c8] sm:$0xff]
        %v436 = vld [vmem:[%s182 + $0x6d0] sm:$0xff]
        %v437 = vld [vmem:[%s182 + $0x6d8] sm:$0xff]
        %v438 = vld [vmem:[%s182 + $0x6e0] sm:$0xff]
        %v439 = vld [vmem:[%s182 + $0x6e8] sm:$0xff]
        %v440 = vld [vmem:[%s182 + $0x6f0] sm:$0xff]
        %v441 = vld [vmem:[%s182 + $0x6f8] sm:$0xff]
        %v442 = vld [vmem:[%s182 + $0x700] sm:$0xff]
        %v443 = vld [vmem:[%s182 + $0x708] sm:$0xff]
        %v444 = vld [vmem:[%s182 + $0x710] sm:$0xff]
        %v445 = vld [vmem:[%s182 + $0x718] sm:$0xff]
        %v446 = vld [vmem:[%s182 + $0x720] sm:$0xff]
        %v447 = vld [vmem:[%s182 + $0x728] sm:$0xff]
        %v448 = vld [vmem:[%s182 + $0x730] sm:$0xff]
        %v449 = vld [vmem:[%s182 + $0x738] sm:$0xff]
        %v450 = vld [vmem:[%s182 + $0x740] sm:$0xff]
        %v451 = vld [vmem:[%s182 + $0x748] sm:$0xff]
        %v452 = vld [vmem:[%s182 + $0x750] sm:$0xff]
        %v453 = vld [vmem:[%s182 + $0x758] sm:$0xff]
        %v454 = vld [vmem:[%s182 + $0x760] sm:$0xff]
        %v455 = vld [vmem:[%s182 + $0x768] sm:$0xff]
        %v456 = vld [vmem:[%s182 + $0x770] sm:$0xff]
        %v457 = vld [vmem:[%s182 + $0x778] sm:$0xff]
        %v458 = vld [vmem:[%s182 + $0x780] sm:$0xff]
        %v459 = vld [vmem:[%s182 + $0x788] sm:$0xff]
        %v460 = vld [vmem:[%s182 + $0x790] sm:$0xff]
        %v461 = vld [vmem:[%s182 + $0x798] sm:$0xff]
        %v462 = vld [vmem:[%s182 + $0x7a0] sm:$0xff]
        %v463 = vld [vmem:[%s182 + $0x7a8] sm:$0xff]
        %v464 = vld [vmem:[%s182 + $0x7b0] sm:$0xff]
        %v465 = vld [vmem:[%s182 + $0x7b8] sm:$0xff]
        %v466 = vld [vmem:[%s182 + $0x7c0] sm:$0xff]
        %v467 = vld [vmem:[%s182 + $0x7c8] sm:$0xff]
        %v468 = vld [vmem:[%s182 + $0x7d0] sm:$0xff]
        %v469 = vld [vmem:[%s182 + $0x7d8] sm:$0xff]
        %v470 = vld [vmem:[%s182 + $0x7e0] sm:$0xff]
        %v471 = vld [vmem:[%s182 + $0x7e8] sm:$0xff]
        %v472 = vld [vmem:[%s182 + $0x7f0] sm:$0xff]
        %v473 = vld [vmem:[%s182 + $0x7f8] sm:$0xff]
        %v474 = vld [vmem:[%s182 + $0x800] sm:$0xff]
        %v475 = vld [vmem:[%s182 + $0x808] sm:$0xff]
        %v476 = vld [vmem:[%s182 + $0x810] sm:$0xff]
        %v477 = vld [vmem:[%s182 + $0x818] sm:$0xff]
        %v478 = vld [vmem:[%s182 + $0x820] sm:$0xff]
        %v479 = vld [vmem:[%s182 + $0x828] sm:$0xff]
        %v480 = vld [vmem:[%s182 + $0x830] sm:$0xff]
        %v481 = vld [vmem:[%s182 + $0x838] sm:$0xff]
        %v482 = vld [vmem:[%s182 + $0x840] sm:$0xff]
        %v483 = vld [vmem:[%s182 + $0x848] sm:$0xff]
        %v484 = vld [vmem:[%s182 + $0x850] sm:$0xff]
        %v485 = vld [vmem:[%s182 + $0x858] sm:$0xff]
        %v486 = vld [vmem:[%s182 + $0x860] sm:$0xff]
        %v487 = vld [vmem:[%s182 + $0x868] sm:$0xff]
        %v488 = vld [vmem:[%s182 + $0x870] sm:$0xff]
        %v489 = vld [vmem:[%s182 + $0x878] sm:$0xff]
        %v490 = vld [vmem:[%s182 + $0x880] sm:$0xff]
        %v491 = vld [vmem:[%s182 + $0x888] sm:$0xff]
        %v492 = vld [vmem:[%s182 + $0x890] sm:$0xff]
        %v493 = vld [vmem:[%s182 + $0x898] sm:$0xff]
        %v494 = vld [vmem:[%s182 + $0x8a0] sm:$0xff]
        %v495 = vld [vmem:[%s182 + $0x8a8] sm:$0xff]
        %v496 = vld [vmem:[%s182 + $0x8b0] sm:$0xff]
        %v497 = vld [vmem:[%s182 + $0x8b8] sm:$0xff]
        %v498 = vld [vmem:[%s182 + $0x8c0] sm:$0xff]
        %v499 = vld [vmem:[%s182 + $0x8c8] sm:$0xff]
        %v500 = vld [vmem:[%s182 + $0x8d0] sm:$0xff]
        %v501 = vld [vmem:[%s182 + $0x8d8] sm:$0xff]
        %v502 = vld [vmem:[%s182 + $0x8e0] sm:$0xff]
        %v503 = vld [vmem:[%s182 + $0x8e8] sm:$0xff]
        %v504 = vld [vmem:[%s182 + $0x8f0] sm:$0xff]
        %v505 = vld [vmem:[%s182 + $0x8f8] sm:$0xff]
        %v506 = vld [vmem:[%s182 + $0x900] sm:$0xff]
        %v507 = vld [vmem:[%s182 + $0x908] sm:$0xff]
        %v508 = vld [vmem:[%s182 + $0x910] sm:$0xff]
        %v509 = vld [vmem:[%s182 + $0x918] sm:$0xff]
        %v510 = vld [vmem:[%s182 + $0x920] sm:$0xff]
        %v511 = vld [vmem:[%s182 + $0x928] sm:$0xff]
        %v512 = vld [vmem:[%s182 + $0x930] sm:$0xff]
        %v513 = vld [vmem:[%s182 + $0x938] sm:$0xff]
        %v514 = vld [vmem:[%s182 + $0x940] sm:$0xff]
        %v515 = vld [vmem:[%s182 + $0x948] sm:$0xff]
        %v516 = vld [vmem:[%s182 + $0x950] sm:$0xff]
        %v517 = vld [vmem:[%s182 + $0x958] sm:$0xff]
        %v518 = vld [vmem:[%s182 + $0x960] sm:$0xff]
        %v519 = vld [vmem:[%s182 + $0x968] sm:$0xff]
        %v520 = vld [vmem:[%s182 + $0x970] sm:$0xff]
        %v521 = vld [vmem:[%s182 + $0x978] sm:$0xff]
        %v522 = vld [vmem:[%s182 + $0x980] sm:$0xff]
        %v523 = vld [vmem:[%s182 + $0x988] sm:$0xff]
        %v524 = vld [vmem:[%s182 + $0x990] sm:$0xff]
        %v525 = vld [vmem:[%s182 + $0x998] sm:$0xff]
        %v526 = vld [vmem:[%s182 + $0x9a0] sm:$0xff]
        %v527 = vld [vmem:[%s182 + $0x9a8] sm:$0xff]
        %v528 = vld [vmem:[%s182 + $0x9b0] sm:$0xff]
        %v529 = vld [vmem:[%s182 + $0x9b8] sm:$0xff]
        %v530 = vld [vmem:[%s182 + $0x9c0] sm:$0xff]
        %v531 = vld [vmem:[%s182 + $0x9c8] sm:$0xff]
        %v532 = vld [vmem:[%s182 + $0x9d0] sm:$0xff]
        %v533 = vld [vmem:[%s182 + $0x9d8] sm:$0xff]
        %v534 = vld [vmem:[%s182 + $0x9e0] sm:$0xff]
        %v535 = vld [vmem:[%s182 + $0x9e8] sm:$0xff]
        %v536 = vld [vmem:[%s182 + $0x9f0] sm:$0xff]
        %v537 = vld [vmem:[%s182 + $0x9f8] sm:$0xff]
        %538 = vmatpush.msra.mxu0 %v278
        %539 = vmatpush.msra.mxu0 %v274
        %540 = vmatpush.msra.mxu0 %v270
        %541 = vmatpush.msra.mxu0 %v266
        %542 = vmatpush.msra.mxu0 %v262
        %543 = vmatpush.msra.mxu0 %v258
        %544 = vmatpush.msra.mxu0 %v254
        %545 = vmatpush.msra.mxu0 %v250
        %546 = vmatpush.msra.mxu0 %v246
        %547 = vmatpush.msra.mxu0 %v242
        %548 = vmatpush.msra.mxu0 %v238
        %549 = vmatpush.msra.mxu0 %v234
        %550 = vmatpush.msra.mxu0 %v230
        %551 = vmatpush.msra.mxu0 %v226
        %552 = vmatpush.msra.mxu0 %v222
        %553 = vmatpush.msra.mxu0 %v218
        %554 = vmatmul.f32.gmra.mxu0 %v208
        %v555 = vpop.f32.mrf.mxu0
        %v556 = vadd.f32 0.0, %v555
        %557 = vmatmul.f32.gmra.mxu0 %v213
        %v558 = vpop.f32.mrf.mxu0
        %v559 = vadd.f32 0.0, %v558
        %560 = vdwg.mxu0
        %561 = vmatpush.msra.mxu0 %v342
        %562 = vmatpush.msra.mxu0 %v338
        %563 = vmatpush.msra.mxu0 %v334
        %564 = vmatpush.msra.mxu0 %v330
        %565 = vmatpush.msra.mxu0 %v326
        %566 = vmatpush.msra.mxu0 %v322
        %567 = vmatpush.msra.mxu0 %v318
        %568 = vmatpush.msra.mxu0 %v314
        %569 = vmatpush.msra.mxu0 %v310
        %570 = vmatpush.msra.mxu0 %v306
        %571 = vmatpush.msra.mxu0 %v302
        %572 = vmatpush.msra.mxu0 %v298
        %573 = vmatpush.msra.mxu0 %v294
        %574 = vmatpush.msra.mxu0 %v290
        %575 = vmatpush.msra.mxu0 %v286
        %576 = vmatpush.msra.mxu0 %v282
        %577 = vmatmul.f32.gmra.mxu0 %v209
        %v578 = vpop.f32.mrf.mxu0
        %v579 = vadd.f32 %v556, %v578
        %580 = vmatmul.f32.gmra.mxu0 %v214
        %v581 = vpop.f32.mrf.mxu0
        %v582 = vadd.f32 %v559, %v581
        %583 = vdwg.mxu0
        %584 = vmatpush.msra.mxu0 %v406
        %585 = vmatpush.msra.mxu0 %v402
        %586 = vmatpush.msra.mxu0 %v398
        %587 = vmatpush.msra.mxu0 %v394
        %588 = vmatpush.msra.mxu0 %v390
        %589 = vmatpush.msra.mxu0 %v386
        %590 = vmatpush.msra.mxu0 %v382
        %591 = vmatpush.msra.mxu0 %v378
        %592 = vmatpush.msra.mxu0 %v374
        %593 = vmatpush.msra.mxu0 %v370
        %594 = vmatpush.msra.mxu0 %v366
        %595 = vmatpush.msra.mxu0 %v362
        %596 = vmatpush.msra.mxu0 %v358
        %597 = vmatpush.msra.mxu0 %v354
        %598 = vmatpush.msra.mxu0 %v350
        %599 = vmatpush.msra.mxu0 %v346
        %600 = vmatmul.f32.gmra.mxu0 %v210
        %v601 = vpop.f32.mrf.mxu0
        %v602 = vadd.f32 %v579, %v601
        %603 = vmatmul.f32.gmra.mxu0 %v215
        %v604 = vpop.f32.mrf.mxu0
        %v605 = vadd.f32 %v582, %v604
        %606 = vdwg.mxu0
        %607 = vmatpush.msra.mxu0 %v470
        %608 = vmatpush.msra.mxu0 %v466
        %609 = vmatpush.msra.mxu0 %v462
        %610 = vmatpush.msra.mxu0 %v458
        %611 = vmatpush.msra.mxu0 %v454
        %612 = vmatpush.msra.mxu0 %v450
        %613 = vmatpush.msra.mxu0 %v446
        %614 = vmatpush.msra.mxu0 %v442
        %615 = vmatpush.msra.mxu0 %v438
        %616 = vmatpush.msra.mxu0 %v434
        %617 = vmatpush.msra.mxu0 %v430
        %618 = vmatpush.msra.mxu0 %v426
        %619 = vmatpush.msra.mxu0 %v422
        %620 = vmatpush.msra.mxu0 %v418
        %621 = vmatpush.msra.mxu0 %v414
        %622 = vmatpush.msra.mxu0 %v410
        %623 = vmatmul.f32.gmra.mxu0 %v211
        %v624 = vpop.f32.mrf.mxu0
        %v625 = vadd.f32 %v602, %v624
        %626 = vmatmul.f32.gmra.mxu0 %v216
        %v627 = vpop.f32.mrf.mxu0
        %v628 = vadd.f32 %v605, %v627
        %629 = vdwg.mxu0
        %630 = vmatpush.msra.mxu0 %v534
        %631 = vmatpush.msra.mxu0 %v530
        %632 = vmatpush.msra.mxu0 %v526
        %633 = vmatpush.msra.mxu0 %v522
        %634 = vmatpush.msra.mxu0 %v518
        %635 = vmatpush.msra.mxu0 %v514
        %636 = vmatpush.msra.mxu0 %v510
        %637 = vmatpush.msra.mxu0 %v506
        %638 = vmatpush.msra.mxu0 %v502
        %639 = vmatpush.msra.mxu0 %v498
        %640 = vmatpush.msra.mxu0 %v494
        %641 = vmatpush.msra.mxu0 %v490
        %642 = vmatpush.msra.mxu0 %v486
        %643 = vmatpush.msra.mxu0 %v482
        %644 = vmatpush.msra.mxu0 %v478
        %645 = vmatpush.msra.mxu0 %v474
        %646 = vmatmul.f32.gmra.mxu0 %v212
        %v647 = vpop.f32.mrf.mxu0
        %v648 = vadd.f32 %v625, %v647
        %649 = vmatmul.f32.gmra.mxu0 %v217
        %v650 = vpop.f32.mrf.mxu0
        %v651 = vadd.f32 %v628, %v650
        %652 = vdwg.mxu0
        %653 = vmatpush.msra.mxu0 %v279
        %654 = vmatpush.msra.mxu0 %v275
        %655 = vmatpush.msra.mxu0 %v271
        %656 = vmatpush.msra.mxu0 %v267
        %657 = vmatpush.msra.mxu0 %v263
        %658 = vmatpush.msra.mxu0 %v259
        %659 = vmatpush.msra.mxu0 %v255
        %660 = vmatpush.msra.mxu0 %v251
        %661 = vmatpush.msra.mxu0 %v247
        %662 = vmatpush.msra.mxu0 %v243
        %663 = vmatpush.msra.mxu0 %v239
        %664 = vmatpush.msra.mxu0 %v235
        %665 = vmatpush.msra.mxu0 %v231
        %666 = vmatpush.msra.mxu0 %v227
        %667 = vmatpush.msra.mxu0 %v223
        %668 = vmatpush.msra.mxu0 %v219
        %669 = vmatmul.f32.gmra.mxu0 %v208
        %v670 = vpop.f32.mrf.mxu0
        %v671 = vadd.f32 0.0, %v670
        %672 = vmatmul.f32.gmra.mxu0 %v213
        %v673 = vpop.f32.mrf.mxu0
        %v674 = vadd.f32 0.0, %v673
        %675 = vdwg.mxu0
        %676 = vmatpush.msra.mxu0 %v343
        %677 = vmatpush.msra.mxu0 %v339
        %678 = vmatpush.msra.mxu0 %v335
        %679 = vmatpush.msra.mxu0 %v331
        %680 = vmatpush.msra.mxu0 %v327
        %681 = vmatpush.msra.mxu0 %v323
        %682 = vmatpush.msra.mxu0 %v319
        %683 = vmatpush.msra.mxu0 %v315
        %684 = vmatpush.msra.mxu0 %v311
        %685 = vmatpush.msra.mxu0 %v307
        %686 = vmatpush.msra.mxu0 %v303
        %687 = vmatpush.msra.mxu0 %v299
        %688 = vmatpush.msra.mxu0 %v295
        %689 = vmatpush.msra.mxu0 %v291
        %690 = vmatpush.msra.mxu0 %v287
        %691 = vmatpush.msra.mxu0 %v283
        %692 = vmatmul.f32.gmra.mxu0 %v209
        %v693 = vpop.f32.mrf.mxu0
        %v694 = vadd.f32 %v671, %v693
        %695 = vmatmul.f32.gmra.mxu0 %v214
        %v696 = vpop.f32.mrf.mxu0
        %v697 = vadd.f32 %v674, %v696
        %698 = vdwg.mxu0
        %699 = vmatpush.msra.mxu0 %v407
        %700 = vmatpush.msra.mxu0 %v403
        %701 = vmatpush.msra.mxu0 %v399
        %702 = vmatpush.msra.mxu0 %v395
        %703 = vmatpush.msra.mxu0 %v391
        %704 = vmatpush.msra.mxu0 %v387
        %705 = vmatpush.msra.mxu0 %v383
        %706 = vmatpush.msra.mxu0 %v379
        %707 = vmatpush.msra.mxu0 %v375
        %708 = vmatpush.msra.mxu0 %v371
        %709 = vmatpush.msra.mxu0 %v367
        %710 = vmatpush.msra.mxu0 %v363
        %711 = vmatpush.msra.mxu0 %v359
        %712 = vmatpush.msra.mxu0 %v355
        %713 = vmatpush.msra.mxu0 %v351
        %714 = vmatpush.msra.mxu0 %v347
        %715 = vmatmul.f32.gmra.mxu0 %v210
        %v716 = vpop.f32.mrf.mxu0
        %v717 = vadd.f32 %v694, %v716
        %718 = vmatmul.f32.gmra.mxu0 %v215
        %v719 = vpop.f32.mrf.mxu0
        %v720 = vadd.f32 %v697, %v719
        %721 = vdwg.mxu0
        %722 = vmatpush.msra.mxu0 %v471
        %723 = vmatpush.msra.mxu0 %v467
        %724 = vmatpush.msra.mxu0 %v463
        %725 = vmatpush.msra.mxu0 %v459
        %726 = vmatpush.msra.mxu0 %v455
        %727 = vmatpush.msra.mxu0 %v451
        %728 = vmatpush.msra.mxu0 %v447
        %729 = vmatpush.msra.mxu0 %v443
        %730 = vmatpush.msra.mxu0 %v439
        %731 = vmatpush.msra.mxu0 %v435
        %732 = vmatpush.msra.mxu0 %v431
        %733 = vmatpush.msra.mxu0 %v427
        %734 = vmatpush.msra.mxu0 %v423
        %735 = vmatpush.msra.mxu0 %v419
        %736 = vmatpush.msra.mxu0 %v415
        %737 = vmatpush.msra.mxu0 %v411
        %738 = vmatmul.f32.gmra.mxu0 %v211
        %v739 = vpop.f32.mrf.mxu0
        %v740 = vadd.f32 %v717, %v739
        %741 = vmatmul.f32.gmra.mxu0 %v216
        %v742 = vpop.f32.mrf.mxu0
        %v743 = vadd.f32 %v720, %v742
        %744 = vdwg.mxu0
        %745 = vmatpush.msra.mxu0 %v535
        %746 = vmatpush.msra.mxu0 %v531
        %747 = vmatpush.msra.mxu0 %v527
        %748 = vmatpush.msra.mxu0 %v523
        %749 = vmatpush.msra.mxu0 %v519
        %750 = vmatpush.msra.mxu0 %v515
        %751 = vmatpush.msra.mxu0 %v511
        %752 = vmatpush.msra.mxu0 %v507
        %753 = vmatpush.msra.mxu0 %v503
        %754 = vmatpush.msra.mxu0 %v499
        %755 = vmatpush.msra.mxu0 %v495
        %756 = vmatpush.msra.mxu0 %v491
        %757 = vmatpush.msra.mxu0 %v487
        %758 = vmatpush.msra.mxu0 %v483
        %759 = vmatpush.msra.mxu0 %v479
        %760 = vmatpush.msra.mxu0 %v475
        %761 = vmatmul.f32.gmra.mxu0 %v212
        %v762 = vpop.f32.mrf.mxu0
        %v763 = vadd.f32 %v740, %v762
        %764 = vmatmul.f32.gmra.mxu0 %v217
        %v765 = vpop.f32.mrf.mxu0
        %v766 = vadd.f32 %v743, %v765
        %767 = vdwg.mxu0
        %768 = vmatpush.msra.mxu0 %v280
        %769 = vmatpush.msra.mxu0 %v276
        %770 = vmatpush.msra.mxu0 %v272
        %771 = vmatpush.msra.mxu0 %v268
        %772 = vmatpush.msra.mxu0 %v264
        %773 = vmatpush.msra.mxu0 %v260
        %774 = vmatpush.msra.mxu0 %v256
        %775 = vmatpush.msra.mxu0 %v252
        %776 = vmatpush.msra.mxu0 %v248
        %777 = vmatpush.msra.mxu0 %v244
        %778 = vmatpush.msra.mxu0 %v240
        %779 = vmatpush.msra.mxu0 %v236
        %780 = vmatpush.msra.mxu0 %v232
        %781 = vmatpush.msra.mxu0 %v228
        %782 = vmatpush.msra.mxu0 %v224
        %783 = vmatpush.msra.mxu0 %v220
        %784 = vmatmul.f32.gmra.mxu0 %v208
        %v785 = vpop.f32.mrf.mxu0
        %v786 = vadd.f32 0.0, %v785
        %787 = vmatmul.f32.gmra.mxu0 %v213
        %v788 = vpop.f32.mrf.mxu0
        %v789 = vadd.f32 0.0, %v788
        %790 = vdwg.mxu0
        %791 = vmatpush.msra.mxu0 %v344
        %792 = vmatpush.msra.mxu0 %v340
        %793 = vmatpush.msra.mxu0 %v336
        %794 = vmatpush.msra.mxu0 %v332
        %795 = vmatpush.msra.mxu0 %v328
        %796 = vmatpush.msra.mxu0 %v324
        %797 = vmatpush.msra.mxu0 %v320
        %798 = vmatpush.msra.mxu0 %v316
        %799 = vmatpush.msra.mxu0 %v312
        %800 = vmatpush.msra.mxu0 %v308
        %801 = vmatpush.msra.mxu0 %v304
        %802 = vmatpush.msra.mxu0 %v300
        %803 = vmatpush.msra.mxu0 %v296
        %804 = vmatpush.msra.mxu0 %v292
        %805 = vmatpush.msra.mxu0 %v288
        %806 = vmatpush.msra.mxu0 %v284
        %807 = vmatmul.f32.gmra.mxu0 %v209
        %v808 = vpop.f32.mrf.mxu0
        %v809 = vadd.f32 %v786, %v808
        %810 = vmatmul.f32.gmra.mxu0 %v214
        %v811 = vpop.f32.mrf.mxu0
        %v812 = vadd.f32 %v789, %v811
        %813 = vdwg.mxu0
        %814 = vmatpush.msra.mxu0 %v408
        %815 = vmatpush.msra.mxu0 %v404
        %816 = vmatpush.msra.mxu0 %v400
        %817 = vmatpush.msra.mxu0 %v396
        %818 = vmatpush.msra.mxu0 %v392
        %819 = vmatpush.msra.mxu0 %v388
        %820 = vmatpush.msra.mxu0 %v384
        %821 = vmatpush.msra.mxu0 %v380
        %822 = vmatpush.msra.mxu0 %v376
        %823 = vmatpush.msra.mxu0 %v372
        %824 = vmatpush.msra.mxu0 %v368
        %825 = vmatpush.msra.mxu0 %v364
        %826 = vmatpush.msra.mxu0 %v360
        %827 = vmatpush.msra.mxu0 %v356
        %828 = vmatpush.msra.mxu0 %v352
        %829 = vmatpush.msra.mxu0 %v348
        %830 = vmatmul.f32.gmra.mxu0 %v210
        %v831 = vpop.f32.mrf.mxu0
        %v832 = vadd.f32 %v809, %v831
        %833 = vmatmul.f32.gmra.mxu0 %v215
        %v834 = vpop.f32.mrf.mxu0
        %v835 = vadd.f32 %v812, %v834
        %836 = vdwg.mxu0
        %837 = vmatpush.msra.mxu0 %v472
        %838 = vmatpush.msra.mxu0 %v468
        %839 = vmatpush.msra.mxu0 %v464
        %840 = vmatpush.msra.mxu0 %v460
        %841 = vmatpush.msra.mxu0 %v456
        %842 = vmatpush.msra.mxu0 %v452
        %843 = vmatpush.msra.mxu0 %v448
        %844 = vmatpush.msra.mxu0 %v444
        %845 = vmatpush.msra.mxu0 %v440
        %846 = vmatpush.msra.mxu0 %v436
        %847 = vmatpush.msra.mxu0 %v432
        %848 = vmatpush.msra.mxu0 %v428
        %849 = vmatpush.msra.mxu0 %v424
        %850 = vmatpush.msra.mxu0 %v420
        %851 = vmatpush.msra.mxu0 %v416
        %852 = vmatpush.msra.mxu0 %v412
        %853 = vmatmul.f32.gmra.mxu0 %v211
        %v854 = vpop.f32.mrf.mxu0
        %v855 = vadd.f32 %v832, %v854
        %856 = vmatmul.f32.gmra.mxu0 %v216
        %v857 = vpop.f32.mrf.mxu0
        %v858 = vadd.f32 %v835, %v857
        %859 = vdwg.mxu0
        %860 = vmatpush.msra.mxu0 %v536
        %861 = vmatpush.msra.mxu0 %v532
        %862 = vmatpush.msra.mxu0 %v528
        %863 = vmatpush.msra.mxu0 %v524
        %864 = vmatpush.msra.mxu0 %v520
        %865 = vmatpush.msra.mxu0 %v516
        %866 = vmatpush.msra.mxu0 %v512
        %867 = vmatpush.msra.mxu0 %v508
        %868 = vmatpush.msra.mxu0 %v504
        %869 = vmatpush.msra.mxu0 %v500
        %870 = vmatpush.msra.mxu0 %v496
        %871 = vmatpush.msra.mxu0 %v492
        %872 = vmatpush.msra.mxu0 %v488
        %873 = vmatpush.msra.mxu0 %v484
        %874 = vmatpush.msra.mxu0 %v480
        %875 = vmatpush.msra.mxu0 %v476
        %876 = vmatmul.f32.gmra.mxu0 %v212
        %v877 = vpop.f32.mrf.mxu0
        %v878 = vadd.f32 %v855, %v877
        %879 = vmatmul.f32.gmra.mxu0 %v217
        %v880 = vpop.f32.mrf.mxu0
        %v881 = vadd.f32 %v858, %v880
        %882 = vdwg.mxu0
        %883 = vmatpush.msra.mxu0 %v281
        %884 = vmatpush.msra.mxu0 %v277
        %885 = vmatpush.msra.mxu0 %v273
        %886 = vmatpush.msra.mxu0 %v269
        %887 = vmatpush.msra.mxu0 %v265
        %888 = vmatpush.msra.mxu0 %v261
        %889 = vmatpush.msra.mxu0 %v257
        %890 = vmatpush.msra.mxu0 %v253
        %891 = vmatpush.msra.mxu0 %v249
        %892 = vmatpush.msra.mxu0 %v245
        %893 = vmatpush.msra.mxu0 %v241
        %894 = vmatpush.msra.mxu0 %v237
        %895 = vmatpush.msra.mxu0 %v233
        %896 = vmatpush.msra.mxu0 %v229
        %897 = vmatpush.msra.mxu0 %v225
        %898 = vmatpush.msra.mxu0 %v221
        %899 = vmatmul.f32.gmra.mxu0 %v208
        %v900 = vpop.f32.mrf.mxu0
        %v901 = vadd.f32 0.0, %v900
        %902 = vmatmul.f32.gmra.mxu0 %v213
        %v903 = vpop.f32.mrf.mxu0
        %v904 = vadd.f32 0.0, %v903
        %905 = vdwg.mxu0
        %906 = vmatpush.msra.mxu0 %v345
        %907 = vmatpush.msra.mxu0 %v341
        %908 = vmatpush.msra.mxu0 %v337
        %909 = vmatpush.msra.mxu0 %v333
        %910 = vmatpush.msra.mxu0 %v329
        %911 = vmatpush.msra.mxu0 %v325
        %912 = vmatpush.msra.mxu0 %v321
        %913 = vmatpush.msra.mxu0 %v317
        %914 = vmatpush.msra.mxu0 %v313
        %915 = vmatpush.msra.mxu0 %v309
        %916 = vmatpush.msra.mxu0 %v305
        %917 = vmatpush.msra.mxu0 %v301
        %918 = vmatpush.msra.mxu0 %v297
        %919 = vmatpush.msra.mxu0 %v293
        %920 = vmatpush.msra.mxu0 %v289
        %921 = vmatpush.msra.mxu0 %v285
        %922 = vmatmul.f32.gmra.mxu0 %v209
        %v923 = vpop.f32.mrf.mxu0
        %v924 = vadd.f32 %v901, %v923
        %925 = vmatmul.f32.gmra.mxu0 %v214
        %v926 = vpop.f32.mrf.mxu0
        %v927 = vadd.f32 %v904, %v926
        %928 = vdwg.mxu0
        %929 = vmatpush.msra.mxu0 %v409
        %930 = vmatpush.msra.mxu0 %v405
        %931 = vmatpush.msra.mxu0 %v401
        %932 = vmatpush.msra.mxu0 %v397
        %933 = vmatpush.msra.mxu0 %v393
        %934 = vmatpush.msra.mxu0 %v389
        %935 = vmatpush.msra.mxu0 %v385
        %936 = vmatpush.msra.mxu0 %v381
        %937 = vmatpush.msra.mxu0 %v377
        %938 = vmatpush.msra.mxu0 %v373
        %939 = vmatpush.msra.mxu0 %v369
        %940 = vmatpush.msra.mxu0 %v365
        %941 = vmatpush.msra.mxu0 %v361
        %942 = vmatpush.msra.mxu0 %v357
        %943 = vmatpush.msra.mxu0 %v353
        %944 = vmatpush.msra.mxu0 %v349
        %945 = vmatmul.f32.gmra.mxu0 %v210
        %v946 = vpop.f32.mrf.mxu0
        %v947 = vadd.f32 %v924, %v946
        %948 = vmatmul.f32.gmra.mxu0 %v215
        %v949 = vpop.f32.mrf.mxu0
        %v950 = vadd.f32 %v927, %v949
        %951 = vdwg.mxu0
        %952 = vmatpush.msra.mxu0 %v473
        %953 = vmatpush.msra.mxu0 %v469
        %954 = vmatpush.msra.mxu0 %v465
        %955 = vmatpush.msra.mxu0 %v461
        %956 = vmatpush.msra.mxu0 %v457
        %957 = vmatpush.msra.mxu0 %v453
        %958 = vmatpush.msra.mxu0 %v449
        %959 = vmatpush.msra.mxu0 %v445
        %960 = vmatpush.msra.mxu0 %v441
        %961 = vmatpush.msra.mxu0 %v437
        %962 = vmatpush.msra.mxu0 %v433
        %963 = vmatpush.msra.mxu0 %v429
        %964 = vmatpush.msra.mxu0 %v425
        %965 = vmatpush.msra.mxu0 %v421
        %966 = vmatpush.msra.mxu0 %v417
        %967 = vmatpush.msra.mxu0 %v413
        %968 = vmatmul.f32.gmra.mxu0 %v211
        %v969 = vpop.f32.mrf.mxu0
        %v970 = vadd.f32 %v947, %v969
        %971 = vmatmul.f32.gmra.mxu0 %v216
        %v972 = vpop.f32.mrf.mxu0
        %v973 = vadd.f32 %v950, %v972
        %974 = vdwg.mxu0
        %975 = vmatpush.msra.mxu0 %v537
        %976 = vmatpush.msra.mxu0 %v533
        %977 = vmatpush.msra.mxu0 %v529
        %978 = vmatpush.msra.mxu0 %v525
        %979 = vmatpush.msra.mxu0 %v521
        %980 = vmatpush.msra.mxu0 %v517
        %981 = vmatpush.msra.mxu0 %v513
        %982 = vmatpush.msra.mxu0 %v509
        %983 = vmatpush.msra.mxu0 %v505
        %984 = vmatpush.msra.mxu0 %v501
        %985 = vmatpush.msra.mxu0 %v497
        %986 = vmatpush.msra.mxu0 %v493
        %987 = vmatpush.msra.mxu0 %v489
        %988 = vmatpush.msra.mxu0 %v485
        %989 = vmatpush.msra.mxu0 %v481
        %990 = vmatpush.msra.mxu0 %v477
        %991 = vmatmul.f32.gmra.mxu0 %v212
        %v992 = vpop.f32.mrf.mxu0
        %v993 = vadd.f32 %v970, %v992
        %994 = vmatmul.f32.gmra.mxu0 %v217
        %v995 = vpop.f32.mrf.mxu0
        %v996 = vadd.f32 %v973, %v995
        %997 = vdwg.mxu0
        %998 = vst [vmem:[%s203] sm:$0xff] %v648
        %999 = vst [vmem:[%s203 + $0x8] sm:$0xff] %v763
        %1000 = vst [vmem:[%s203 + $0x10] sm:$0xff] %v878
        %1001 = vst [vmem:[%s203 + $0x18] sm:$0xff] %v993
        %1002 = vst [vmem:[%s203 + $0x20] sm:$0xff] %v651
        %1003 = vst [vmem:[%s203 + $0x28] sm:$0xff] %v766
        %1004 = vst [vmem:[%s203 + $0x30] sm:$0xff] %v881
        %1005 = vst [vmem:[%s203 + $0x38] sm:$0xff] %v996
        %s1006 = sand.u32 %s94, 1
        %s1007 = scalar_lea.sflag [#allocation4], %s1006
        %s1008 = sand.u32 %s94, 1
        %s1009 = smul.addr %s1008, 64
        %s1010 = scalar_lea.vmem [#allocation7], %s1009
        // Predicated region
        $region37: #{tpu_custom_call.1} parent=27 // pred_check
          %p1011 = pneg %p104
        $region38: #{tpu_custom_call.1} parent=27 // pred_check_branch
          %1013 = sbr.rel (%p1011) target = $region40
        $region39: #{tpu_custom_call.1} parent=27 // pred_region
          %s1014 = smul.u32 2, %s25
          %s1015 = smul.u32 4, %s24
          %1017 = vsyncadd %s1007, 0
          %s1018 = smul.addr %s1014, 8
          %s1019 = sadd.s32 %s1015, %s1018
          %s1020 = smul.addr %s1019, 8
          %s1021 = scalar_lea.hbm %s2, %s1020
          %s1022 = sshll.u32 %s1010, 4
          %s1023 = int_to_ptr.vmem [resolvable:$true] %s1022
          %s1024 = sshll.u32 %s1021, 4
          %s1025 = int_to_ptr.hbm [resolvable:$true] %s1024
          %1030 = dma.vmem_to_hbm [thread:$0]  %s1023, 1024, %s1025, %s1007, 512, 1024, 32
        $region40: #{tpu_custom_call.1} parent=27 // pred_fallthru
          _
      $region28: #{tpu_custom_call.1} parent=5 // pred_fallthru
        _
      %p1031 = scmp.le.s32.totalorder 2, %s15
      // Predicated region
      $region41: #{tpu_custom_call.1} parent=5 // pred_check
        %p1032 = pneg %p1031
      $region42: #{tpu_custom_call.1} parent=5 // pred_check_branch
        %1034 = sbr.rel (%p1032) target = $region44
      $region43: #{tpu_custom_call.1} parent=5 // pred_region
        %s1035 = ssub.s32 %s15, 2
        // Predicated region
        $region45: #{tpu_custom_call.1} parent=43 // pred_check
          %p1036 = pneg %p110
        $region46: #{tpu_custom_call.1} parent=43 // pred_check_branch
          %1038 = sbr.rel (%p1036) target = $region48
        $region47: #{tpu_custom_call.1} parent=43 // pred_region
          %s1039 = sand.u32 %s95, 1
          %s1040 = scalar_lea.sflag [#allocation4], %s1039
          %s1041 = sand.u32 %s95, 1
          %s1042 = smul.addr %s1041, 64
          %s1043 = scalar_lea.vmem [#allocation7], %s1042
          %1045 = dma.done %s1040, 1024
        $region48: #{tpu_custom_call.1} parent=43 // pred_fallthru
          _
      $region44: #{tpu_custom_call.1} parent=5 // pred_fallthru
        _
    $region6: #{tpu_custom_call.1} parent=1 // loop_footer
      %s19 = sadd.s32 1, %s15
    $region7: #{tpu_custom_call.1} parent=1 // loop_footer_branch
      %14 = sbr.rel target = $region3
    $region8: #{tpu_custom_call.1} parent=1 // loop_exit
      _
    %1046 = vsyncpa [#allocation3], 1
    %s1047 = scalar_lea.sflag [#allocation3], 1
    %1048 = vsyncpa %s1047, 1
    %1049 = vsyncpa [#allocation6], 1
    %s1050 = scalar_lea.sflag [#allocation6], 1
    %1051 = vsyncpa %s1050, 1
    %1052 = vsyncpa [#allocation4], 1
    %s1053 = scalar_lea.sflag [#allocation4], 1
    %1054 = vsyncpa %s1053, 1

</llo_original>
